<compile_context>
chip_gen: v6e
topology: v6e:2x2x1
jax: 0.10.0
libtpu: 0.0.40
codegen_flags: <defaults>
</compile_context>

<pallas_src>
import functools

import jax
import jax.numpy as jnp
import numpy as np
from jax.experimental import pallas as pl
from jax.experimental.pallas import tpu as pltpu


def _attention_body(x_ref, w_ref, b_ref, out_ref, attn_ref, *, num_heads, dim_out):
    # Block views:
    #   x_ref   : (Tb, N, dim_in)
    #   w_ref   : (dim_in, 3*H*dim_out)   fused [Wq | Wk | Wv]
    #   b_ref   : (1, 3*H*dim_out)        fused [bq | bk | bv]
    #   out_ref : (Tb, N, H*dim_out)
    #   attn_ref: (H, Tb, N, N)           (or None for the out-only variant)
    tb, n, dim_in = x_ref.shape
    hd = num_heads * dim_out

    x2 = x_ref[...].reshape(tb * n, dim_in)          # fold batch into matmul M-dim
    w = w_ref[...]
    b = b_ref[...]

    # One fused projection matmul on the MXU: (Tb*N, dim_in) @ (dim_in, 3*H*dim_out)
    qkv = jnp.dot(x2, w, preferred_element_type=jnp.float32) + b
    qkv = qkv.reshape(tb, n, 3 * hd)

    scale = 1.0 / float(dim_out) ** 0.5
    head_outs = []
    for h in range(num_heads):                       # static unroll over heads
        q_h = qkv[:, :, h * dim_out:(h + 1) * dim_out] * scale          # (Tb,N,D)
        k_h = qkv[:, :, hd + h * dim_out: hd + (h + 1) * dim_out]
        v_h = qkv[:, :, 2 * hd + h * dim_out: 2 * hd + (h + 1) * dim_out]

        # Batched QK^T contracting the last dims of both operands (no k.T / XLU).
        s = jnp.einsum('bqd,bkd->bqk', q_h, k_h,
                       preferred_element_type=jnp.float32)              # (Tb,N,N)

        # softmax over last axis (matches F.softmax(..., dim=-1))
        m = jnp.max(s, axis=-1, keepdims=True)
        e = jnp.exp(s - m)
        denom = jnp.sum(e, axis=-1, keepdims=True)
        p = e * pl.reciprocal(denom, approx=True)                       # (Tb,N,N)

        o = jnp.einsum('bqk,bkd->bqd', p, v_h,
                       preferred_element_type=jnp.float32)              # (Tb,N,D)

        if attn_ref is not None:
            attn_ref[h] = p.astype(attn_ref.dtype)
        head_outs.append(o)

    # Single lane-dense store: all heads concatenated -> (Tb, N, H*dim_out).
    out_ref[...] = jnp.concatenate(head_outs, axis=-1).astype(out_ref.dtype)


def _kernel_with_attn(x_ref, w_ref, b_ref, out_ref, attn_ref, *, num_heads, dim_out):
    _attention_body(x_ref, w_ref, b_ref, out_ref, attn_ref,
                    num_heads=num_heads, dim_out=dim_out)


def _kernel_out_only(x_ref, w_ref, b_ref, out_ref, *, num_heads, dim_out):
    _attention_body(x_ref, w_ref, b_ref, out_ref, None,
                    num_heads=num_heads, dim_out=dim_out)


def _pick_block_b(B, N, target_rows=512, min_rows_for_split=128):
    """Largest batch tile (divisor of B) with Tb*N <= target_rows; prefer >= 2
    grid steps (megacore / v7x 2-TC) only if each step still has an MXU-sized M."""
    divisors = [d for d in range(1, B + 1) if B % d == 0]
    cands = [d for d in divisors if d * N <= target_rows] or [1]
    block_b = max(cands)
    multi = [d for d in cands if (B // d) >= 2 and d * N >= min_rows_for_split]
    if multi:
        block_b = max(multi)
    return block_b


def self_attention_pallas(x, wq, wk, wv, bq, bk, bv, *, num_heads, dim_out,
                          return_attn=True, block_b=None):
    """
    x  : (B, N, dim_in)
    w* : (dim_in, H*dim_out)    (JAX layout of nn.Linear(dim_in, H*dim_out).weight.T)
    b* : (H*dim_out,)
    returns (out, attn) with out: (B, N, H, dim_out), attn: (H, B, N, N)
            or just out if return_attn=False.
    """
    B, N, dim_in = x.shape
    hd = num_heads * dim_out
    assert wq.shape == (dim_in, hd) and wk.shape == (dim_in, hd) and wv.shape == (dim_in, hd)
    assert bq.shape == (hd,) and bk.shape == (hd,) and bv.shape == (hd,)

    # Fuse Q/K/V parameters once (tiny, trace-time concat).
    w_qkv = jnp.concatenate([wq, wk, wv], axis=1)                 # (dim_in, 3*H*dim_out)
    b_qkv = jnp.concatenate([bq, bk, bv], axis=0).reshape(1, 3 * hd)

    if block_b is None:
        block_b = _pick_block_b(B, N)
    assert B % block_b == 0, "block_b must divide B"
    grid = (B // block_b,)

    x_spec = pl.BlockSpec((block_b, N, dim_in), lambda i: (i, 0, 0))
    w_spec = pl.BlockSpec((dim_in, 3 * hd), lambda i: (0, 0))
    b_spec = pl.BlockSpec((1, 3 * hd), lambda i: (0, 0))
    out_spec = pl.BlockSpec((block_b, N, hd), lambda i: (i, 0, 0))

    out_shapes = [jax.ShapeDtypeStruct((B, N, hd), x.dtype)]
    out_specs = [out_spec]
    if return_attn:
        out_shapes.append(jax.ShapeDtypeStruct((num_heads, B, N, N), x.dtype))
        out_specs.append(pl.BlockSpec((num_heads, block_b, N, N),
                                      lambda i: (0, i, 0, 0)))
        kernel = functools.partial(_kernel_with_attn,
                                   num_heads=num_heads, dim_out=dim_out)
    else:
        kernel = functools.partial(_kernel_out_only,
                                   num_heads=num_heads, dim_out=dim_out)

    results = pl.pallas_call(
        kernel,
        out_shape=tuple(out_shapes),
        grid_spec=pltpu.PrefetchScalarGridSpec(
            num_scalar_prefetch=0,
            grid=grid,
            in_specs=[x_spec, w_spec, b_spec],
            out_specs=out_specs,
        ),
        compiler_params=pltpu.CompilerParams(
            dimension_semantics=("parallel",)),
    )(x, w_qkv, b_qkv)

    # (B, N, H*dim_out) -> (B, N, H, dim_out): contiguous, metadata-only reshape
    # (replaces the previous HBM transpose pass).
    out = results[0].reshape(B, N, num_heads, dim_out)
    if return_attn:
        return out, results[1]
    return out


def _reference(x, wq, wk, wv, bq, bk, bv, num_heads, dim_out):
    # Pure-JAX mirror of the PyTorch forward.
    B, N, _ = x.shape

    def proj(w, b):
        y = x @ w + b                                             # (B, N, H*D)
        return jnp.transpose(y.reshape(B, N, num_heads, dim_out), (2, 0, 1, 3))

    q, k, v = proj(wq, bq), proj(wk, bk), proj(wv, bv)            # (H, B, N, D)
    s = jnp.einsum('hbqd,hbkd->hbqk', q, k) / (dim_out ** 0.5)
    attn = jax.nn.softmax(s, axis=-1)
    out = jnp.einsum('hbqk,hbkd->hbqd', attn, v)
    return jnp.transpose(out, (1, 2, 0, 3)), attn                 # (B,N,H,D), (H,B,N,N)


if __name__ == "__main__":
    # Small shapes consistent with the module's forward.
    B, N, dim_in, dim_out, H = 2, 8, 32, 16, 2

    key = jax.random.PRNGKey(0)
    kx, kwq, kwk, kwv, kbq, kbk, kbv = jax.random.split(key, 7)

    x = jax.random.normal(kx, (B, N, dim_in), dtype=jnp.float32)

    # Deterministic parameter init (PyTorch-Linear-like uniform scale).
    bound = 1.0 / np.sqrt(dim_in)
    wq = jax.random.uniform(kwq, (dim_in, H * dim_out), jnp.float32, -bound, bound)
    wk = jax.random.uniform(kwk, (dim_in, H * dim_out), jnp.float32, -bound, bound)
    wv = jax.random.uniform(kwv, (dim_in, H * dim_out), jnp.float32, -bound, bound)
    bq = jax.random.uniform(kbq, (H * dim_out,), jnp.float32, -bound, bound)
    bk = jax.random.uniform(kbk, (H * dim_out,), jnp.float32, -bound, bound)
    bv = jax.random.uniform(kbv, (H * dim_out,), jnp.float32, -bound, bound)

    out, attn = self_attention_pallas(x, wq, wk, wv, bq, bk, bv,
                                      num_heads=H, dim_out=dim_out)
    out = jax.block_until_ready(out)
    attn = jax.block_until_ready(attn)

    out_exp, attn_exp = _reference(x, wq, wk, wv, bq, bk, bv, H, dim_out)
    assert out.shape == (B, N, H, dim_out)
    assert attn.shape == (H, B, N, N)
    # approx=True softmax reciprocal -> slightly looser tolerance than exact f32.
    np.testing.assert_allclose(np.asarray(out), np.asarray(out_exp), rtol=2e-3, atol=2e-3)
    np.testing.assert_allclose(np.asarray(attn), np.asarray(attn_exp), rtol=2e-3, atol=2e-3)

    # Output-only variant (skips the O(N^2) attention writeback).
    out_only = self_attention_pallas(x, wq, wk, wv, bq, bk, bv,
                                     num_heads=H, dim_out=dim_out, return_attn=False)
    out_only = jax.block_until_ready(out_only)
    np.testing.assert_allclose(np.asarray(out_only), np.asarray(out_exp),
                               rtol=2e-3, atol=2e-3)

    print("KERNEL_OK")
</pallas_src>

<mosaic_0001>
module attributes {stable_mosaic.version = 11 : i64} {
  func.func @_kernel_with_attn(%arg0: i32, %arg1: memref<2x8x32xf32, #tpu.memory_space<vmem>>, %arg2: memref<32x96xf32, #tpu.memory_space<vmem>>, %arg3: memref<1x96xf32, #tpu.memory_space<vmem>>, %arg4: memref<2x8x32xf32, #tpu.memory_space<vmem>>, %arg5: memref<2x2x8x8xf32, #tpu.memory_space<vmem>>) attributes {dimension_semantics = [#tpu.dimension_semantics<parallel>], iteration_bounds = array<i64: 1>, scalar_prefetch = 0 : i64, scratch_operands = 0 : i64, tpu.core_type = #tpu.core_type<tc>, window_params = [{transform_indices = @transform_0, window_bounds = array<i64: 2, 8, 32>}, {pipeline_mode = #tpu.pipeline_mode<synchronous>, transform_indices = @transform_1, window_bounds = array<i64: 32, 96>}, {pipeline_mode = #tpu.pipeline_mode<synchronous>, transform_indices = @transform_2, window_bounds = array<i64: 1, 96>}, {transform_indices = @transform_3, window_bounds = array<i64: 2, 8, 32>}, {transform_indices = @transform_4, window_bounds = array<i64: 2, 2, 8, 8>}]} {
    %c0 = arith.constant 0 : index
    %c0_0 = arith.constant 0 : index
    %c0_1 = arith.constant 0 : index
    %0 = vector.load %arg1[%c0, %c0_0, %c0_1] : memref<2x8x32xf32, #tpu.memory_space<vmem>>, vector<2x8x32xf32>
    %1 = vector.shape_cast %0 : vector<2x8x32xf32> to vector<16x32xf32>
    %c0_2 = arith.constant 0 : index
    %c0_3 = arith.constant 0 : index
    %2 = vector.load %arg2[%c0_2, %c0_3] : memref<32x96xf32, #tpu.memory_space<vmem>>, vector<32x96xf32>
    %c0_4 = arith.constant 0 : index
    %c0_5 = arith.constant 0 : index
    %3 = vector.load %arg3[%c0_4, %c0_5] : memref<1x96xf32, #tpu.memory_space<vmem>>, vector<1x96xf32>
    %cst = arith.constant dense<0.000000e+00> : vector<16x96xf32>
    %4 = tpu.matmul %1, %2, %cst {dimension_numbers = #tpu.dot_dimension_numbers<[1], [0], [0], [1], [0, 0, 1, 1], [], []>} : vector<16x32xf32>, vector<32x96xf32>, vector<16x96xf32> -> vector<16x96xf32>
    %5 = vector.broadcast %3 : vector<1x96xf32> to vector<16x96xf32>
    %6 = arith.addf %4, %5 : vector<16x96xf32>
    %7 = vector.shape_cast %6 : vector<16x96xf32> to vector<2x8x96xf32>
    %8 = vector.extract_strided_slice %7 {offsets = [0, 0, 0], sizes = [2, 8, 16], strides = [1, 1, 1]} : vector<2x8x96xf32> to vector<2x8x16xf32>
    %cst_6 = arith.constant 2.500000e-01 : f32
    %9 = vector.broadcast %cst_6 : f32 to vector<2x8x16xf32>
    %10 = arith.mulf %8, %9 : vector<2x8x16xf32>
    %11 = vector.extract_strided_slice %7 {offsets = [0, 0, 32], sizes = [2, 8, 16], strides = [1, 1, 1]} : vector<2x8x96xf32> to vector<2x8x16xf32>
    %12 = vector.extract_strided_slice %7 {offsets = [0, 0, 64], sizes = [2, 8, 16], strides = [1, 1, 1]} : vector<2x8x96xf32> to vector<2x8x16xf32>
    "tpu.trace_start"() <{level = 10 : i32, message = "bqd,bkd->bqk"}> : () -> ()
    %cst_7 = arith.constant dense<0.000000e+00> : vector<2x8x8xf32>
    %13 = tpu.matmul %10, %11, %cst_7 {dimension_numbers = #tpu.dot_dimension_numbers<[2], [2], [1], [1], [0, 0, 0, 1, 1, 1], [0], [0]>} : vector<2x8x16xf32>, vector<2x8x16xf32>, vector<2x8x8xf32> -> vector<2x8x8xf32>
    "tpu.trace_stop"() : () -> ()
    %cst_8 = arith.constant dense<0xFF800000> : vector<2x8xf32>
    %14 = vector.multi_reduction <maximumf>, %13, %cst_8 [2] : vector<2x8x8xf32> to vector<2x8xf32>
    %15 = vector.shape_cast %14 : vector<2x8xf32> to vector<2x8x1xf32>
    %16 = vector.broadcast %15 : vector<2x8x1xf32> to vector<2x8x8xf32>
    %17 = arith.subf %13, %16 : vector<2x8x8xf32>
    %18 = math.exp %17 : vector<2x8x8xf32>
    %cst_9 = arith.constant dense<0.000000e+00> : vector<2x8xf32>
    %19 = vector.multi_reduction <add>, %18, %cst_9 [2] : vector<2x8x8xf32> to vector<2x8xf32>
    %20 = vector.shape_cast %19 : vector<2x8xf32> to vector<2x8x1xf32>
    %21 = tpu.reciprocal %20 {approx = true} : vector<2x8x1xf32> -> vector<2x8x1xf32>
    %22 = vector.broadcast %21 : vector<2x8x1xf32> to vector<2x8x8xf32>
    %23 = arith.mulf %18, %22 : vector<2x8x8xf32>
    "tpu.trace_start"() <{level = 10 : i32, message = "bqk,bkd->bqd"}> : () -> ()
    %cst_10 = arith.constant dense<0.000000e+00> : vector<2x8x16xf32>
    %24 = tpu.matmul %23, %12, %cst_10 {dimension_numbers = #tpu.dot_dimension_numbers<[2], [1], [1], [2], [0, 0, 0, 1, 1, 2], [0], [0]>} : vector<2x8x8xf32>, vector<2x8x16xf32>, vector<2x8x16xf32> -> vector<2x8x16xf32>
    "tpu.trace_stop"() : () -> ()
    %c0_11 = arith.constant 0 : index
    %c0_12 = arith.constant 0 : index
    %c0_13 = arith.constant 0 : index
    %c0_14 = arith.constant 0 : index
    %25 = vector.load %arg5[%c0_11, %c0_12, %c0_13, %c0_14] : memref<2x2x8x8xf32, #tpu.memory_space<vmem>>, vector<1x2x8x8xf32>
    %26 = vector.shape_cast %25 : vector<1x2x8x8xf32> to vector<2x8x8xf32>
    %27 = vector.shape_cast %23 : vector<2x8x8xf32> to vector<1x2x8x8xf32>
    tpu.vector_store %arg5[%c0_11, %c0_12, %c0_13, %c0_14], %27 {strides = array<i32>} : memref<2x2x8x8xf32, #tpu.memory_space<vmem>>, vector<1x2x8x8xf32>,
    %28 = vector.extract_strided_slice %7 {offsets = [0, 0, 16], sizes = [2, 8, 16], strides = [1, 1, 1]} : vector<2x8x96xf32> to vector<2x8x16xf32>
    %cst_15 = arith.constant 2.500000e-01 : f32
    %29 = vector.broadcast %cst_15 : f32 to vector<2x8x16xf32>
    %30 = arith.mulf %28, %29 : vector<2x8x16xf32>
    %31 = vector.extract_strided_slice %7 {offsets = [0, 0, 48], sizes = [2, 8, 16], strides = [1, 1, 1]} : vector<2x8x96xf32> to vector<2x8x16xf32>
    %32 = vector.extract_strided_slice %7 {offsets = [0, 0, 80], sizes = [2, 8, 16], strides = [1, 1, 1]} : vector<2x8x96xf32> to vector<2x8x16xf32>
    "tpu.trace_start"() <{level = 10 : i32, message = "bqd,bkd->bqk"}> : () -> ()
    %cst_16 = arith.constant dense<0.000000e+00> : vector<2x8x8xf32>
    %33 = tpu.matmul %30, %31, %cst_16 {dimension_numbers = #tpu.dot_dimension_numbers<[2], [2], [1], [1], [0, 0, 0, 1, 1, 1], [0], [0]>} : vector<2x8x16xf32>, vector<2x8x16xf32>, vector<2x8x8xf32> -> vector<2x8x8xf32>
    "tpu.trace_stop"() : () -> ()
    %cst_17 = arith.constant dense<0xFF800000> : vector<2x8xf32>
    %34 = vector.multi_reduction <maximumf>, %33, %cst_17 [2] : vector<2x8x8xf32> to vector<2x8xf32>
    %35 = vector.shape_cast %34 : vector<2x8xf32> to vector<2x8x1xf32>
    %36 = vector.broadcast %35 : vector<2x8x1xf32> to vector<2x8x8xf32>
    %37 = arith.subf %33, %36 : vector<2x8x8xf32>
    %38 = math.exp %37 : vector<2x8x8xf32>
    %cst_18 = arith.constant dense<0.000000e+00> : vector<2x8xf32>
    %39 = vector.multi_reduction <add>, %38, %cst_18 [2] : vector<2x8x8xf32> to vector<2x8xf32>
    %40 = vector.shape_cast %39 : vector<2x8xf32> to vector<2x8x1xf32>
    %41 = tpu.reciprocal %40 {approx = true} : vector<2x8x1xf32> -> vector<2x8x1xf32>
    %42 = vector.broadcast %41 : vector<2x8x1xf32> to vector<2x8x8xf32>
    %43 = arith.mulf %38, %42 : vector<2x8x8xf32>
    "tpu.trace_start"() <{level = 10 : i32, message = "bqk,bkd->bqd"}> : () -> ()
    %cst_19 = arith.constant dense<0.000000e+00> : vector<2x8x16xf32>
    %44 = tpu.matmul %43, %32, %cst_19 {dimension_numbers = #tpu.dot_dimension_numbers<[2], [1], [1], [2], [0, 0, 0, 1, 1, 2], [0], [0]>} : vector<2x8x8xf32>, vector<2x8x16xf32>, vector<2x8x16xf32> -> vector<2x8x16xf32>
    "tpu.trace_stop"() : () -> ()
    %c1 = arith.constant 1 : index
    %c0_20 = arith.constant 0 : index
    %c0_21 = arith.constant 0 : index
    %c0_22 = arith.constant 0 : index
    %45 = vector.load %arg5[%c1, %c0_20, %c0_21, %c0_22] : memref<2x2x8x8xf32, #tpu.memory_space<vmem>>, vector<1x2x8x8xf32>
    %46 = vector.shape_cast %45 : vector<1x2x8x8xf32> to vector<2x8x8xf32>
    %47 = vector.shape_cast %43 : vector<2x8x8xf32> to vector<1x2x8x8xf32>
    tpu.vector_store %arg5[%c1, %c0_20, %c0_21, %c0_22], %47 {strides = array<i32>} : memref<2x2x8x8xf32, #tpu.memory_space<vmem>>, vector<1x2x8x8xf32>,
    %48 = tpu.concatenate %24, %44 in 2 : vector<2x8x16xf32>, vector<2x8x16xf32> -> vector<2x8x32xf32>
    %c0_23 = arith.constant 0 : index
    %c0_24 = arith.constant 0 : index
    %c0_25 = arith.constant 0 : index
    %49 = vector.load %arg4[%c0_23, %c0_24, %c0_25] : memref<2x8x32xf32, #tpu.memory_space<vmem>>, vector<2x8x32xf32>
    tpu.vector_store %arg4[%c0_23, %c0_24, %c0_25], %48 {strides = array<i32>} : memref<2x8x32xf32, #tpu.memory_space<vmem>>, vector<2x8x32xf32>,
    return
  }
  func.func @transform_0(%arg0: i32) -> (i32, i32, i32) {
    %c0_i32 = arith.constant 0 : i32
    %c0_i32_0 = arith.constant 0 : i32
    %c0_i32_1 = arith.constant 0 : i32
    return %arg0, %c0_i32, %c0_i32_0 : i32, i32, i32
  }
  func.func @transform_1(%arg0: i32) -> (i32, i32) {
    %c0_i32 = arith.constant 0 : i32
    %c0_i32_0 = arith.constant 0 : i32
    %c0_i32_1 = arith.constant 0 : i32
    return %c0_i32, %c0_i32_0 : i32, i32
  }
  func.func @transform_2(%arg0: i32) -> (i32, i32) {
    %c0_i32 = arith.constant 0 : i32
    %c0_i32_0 = arith.constant 0 : i32
    %c0_i32_1 = arith.constant 0 : i32
    return %c0_i32, %c0_i32_0 : i32, i32
  }
  func.func @transform_3(%arg0: i32) -> (i32, i32, i32) {
    %c0_i32 = arith.constant 0 : i32
    %c0_i32_0 = arith.constant 0 : i32
    %c0_i32_1 = arith.constant 0 : i32
    return %arg0, %c0_i32, %c0_i32_0 : i32, i32, i32
  }
  func.func @transform_4(%arg0: i32) -> (i32, i32, i32, i32) {
    %c0_i32 = arith.constant 0 : i32
    %c0_i32_0 = arith.constant 0 : i32
    %c0_i32_1 = arith.constant 0 : i32
    %c0_i32_2 = arith.constant 0 : i32
    return %c0_i32, %arg0, %c0_i32_0, %c0_i32_1 : i32, i32, i32, i32
  }
}

</mosaic_0001>

<llo_original>
// kernel: tpu_custom_call.1
$region0: #{tpu_custom_call.1}
  #allocation0 [shape = 'u32[]', space=smem, size = 0x4, offset = 0x4, fixed_abs, tag = 'smem constant byte address 0x4 - core index']
  #allocation1 [shape = 'u32[144,128]{1,0:T(1,128)}', space=vmem, size = 0x12000, scoped, tag = 'internal scratch']
  %s0 = inlined_call_operand.hbm [shape: f32[2,8,32], index: 0, kind: input, shape index: {}]
  %s1 = inlined_call_operand.hbm [shape: f32[32,96], index: 1, kind: input, shape index: {}]
  %s2 = inlined_call_operand.vmem [shape: f32[1,96], index: 2, kind: input, shape index: {}]
  %s3 = inlined_call_operand.hbm [shape: f32[2,8,32], index: 3, kind: output, shape index: {0}]
  %s4 = inlined_call_operand.hbm [shape: f32[2,2,8,8], index: 4, kind: output, shape index: {1}]
  %5 = xla_tuple %s3, %s4
  %s6 = sld [smem:[#allocation0]]
  $region38: #{tpu_custom_call.1} parent=0
    _
  %s8 = ssub.s32 1, %s6
  %s9 = scalar_select 0, %s8, %s6
  $region1: #{tpu_custom_call.1} parent=0
    #allocation2 [shape = 'u8[8192]{0}', space=vmem, size = 0x2000, scoped, tag = 'input window, operand 0, single buffered']
    #allocation3 [shape = 's32[1]{0}', space=sflag, size = 0x4, scoped, tag = 'scoped memory for tpu_custom_call.1']
    #allocation4 [shape = 's32[1]{0}', space=sflag, size = 0x4, scoped, tag = 'scoped memory for tpu_custom_call.1']
    #allocation5 [shape = 'u8[16384]{0}', space=vmem, size = 0x4000, scoped, tag = 'input window, operand 1, single buffered']
    #allocation6 [shape = 's32[1]{0}', space=sflag, size = 0x4, scoped, tag = 'scoped memory for tpu_custom_call.1']
    #allocation7 [shape = 'u8[8192]{0}', space=vmem, size = 0x2000, scoped, tag = 'output window, operand 0, single buffered']
    #allocation8 [shape = 'u8[16384]{0}', space=vmem, size = 0x4000, scoped, tag = 'output window, operand 1, single buffered']
    #allocation9 [shape = 's32[1]{0}', space=sflag, size = 0x4, scoped, tag = 'scoped memory for tpu_custom_call.1']
    %10 = vsyncpa [#allocation3], 0
    %11 = vsyncpa [#allocation6], 0
    %12 = vsyncpa [#allocation4], 0
    %13 = vsyncpa [#allocation9], 0
    // Predicated region
    $region2: #{tpu_custom_call.1} parent=1 // pred_check
      _
    $region3: #{tpu_custom_call.1} parent=1 // pred_check_branch
      %15 = sbr.rel (0) target = $region5
    $region4: #{tpu_custom_call.1} parent=1 // pred_region
      %s17 = ssub.s32 256, 256
      %18 = vsyncadd [#allocation3], %s17
      %s19 = sshll.u32 [#allocation2], 4
      %s20 = int_to_ptr.vmem [resolvable:$true] %s19
      %25 = dma.hbm_to_vmem [thread:$0]  %s0, 256, %s20, [#allocation3], 128, 128, 8
    $region5: #{tpu_custom_call.1} parent=1 // pred_fallthru
      _
    // Predicated region
    $region6: #{tpu_custom_call.1} parent=1 // pred_check
      _
    $region7: #{tpu_custom_call.1} parent=1 // pred_check_branch
      %27 = sbr.rel (0) target = $region9
    $region8: #{tpu_custom_call.1} parent=1 // pred_region
      %s29 = ssub.s32 512, 512
      %30 = vsyncadd [#allocation6], %s29
      %s31 = sshll.u32 [#allocation5], 4
      %s32 = int_to_ptr.vmem [resolvable:$true] %s31
      %37 = dma.hbm_to_vmem [thread:$0]  %s1, 512, %s32, [#allocation6], 128, 128, 8
    $region9: #{tpu_custom_call.1} parent=1 // pred_fallthru
      _
    // Predicated region
    $region10: #{tpu_custom_call.1} parent=1 // pred_check
      _
    $region11: #{tpu_custom_call.1} parent=1 // pred_check_branch
      %39 = sbr.rel (0) target = $region13
    $region12: #{tpu_custom_call.1} parent=1 // pred_region
      _
    $region13: #{tpu_custom_call.1} parent=1 // pred_fallthru
      _
    // Predicated region
    $region14: #{tpu_custom_call.1} parent=1 // pred_check
      _
    $region15: #{tpu_custom_call.1} parent=1 // pred_check_branch
      %41 = sbr.rel (0) target = $region17
    $region16: #{tpu_custom_call.1} parent=1 // pred_region
      %42 = dma.done [#allocation3], 256
    $region17: #{tpu_custom_call.1} parent=1 // pred_fallthru
      _
    // Predicated region
    $region18: #{tpu_custom_call.1} parent=1 // pred_check
      _
    $region19: #{tpu_custom_call.1} parent=1 // pred_check_branch
      %44 = sbr.rel (0) target = $region21
    $region20: #{tpu_custom_call.1} parent=1 // pred_region
      %45 = dma.done [#allocation6], 512
    $region21: #{tpu_custom_call.1} parent=1 // pred_fallthru
      _
    %v46 = vld [vmem:[#allocation2] sm:$0xff]
    %v47 = vld [vmem:[#allocation2 + $0x8] sm:$0xff]
    %v48 = vld [vmem:[#allocation5] sm:$0xff]
    %v49 = vld [vmem:[#allocation5 + $0x8] sm:$0xff]
    %v50 = vld [vmem:[#allocation5 + $0x10] sm:$0xff]
    %v51 = vld [vmem:[#allocation5 + $0x18] sm:$0xff]
    %v52 = vld [vmem:[%s2] sm:$0x1]
    %v54 = vlaneseq
    %v55 = vshrl.u32 %v54, 7
    %v56 = vsub.s32 0, %v55
    %v57 = vrot.slane %v52, %v56
    %vm59 = vcmask 261120
    %v61 = vsel %vm59, %v46, 0
    %v64 = vsel %vm59, %v47, 0
    %66 = vmatprep.subr.mxu0 0.0
    %67 = vmatpush1.msra.mxu0 0.0
    %68 = vmatprep.subr.mxu0 0.0
    %69 = vmatpush1.msra.mxu0 0.0
    %70 = vmatprep.subr.mxu0 0.0
    %71 = vmatpush1.msra.mxu0 0.0
    %72 = vmatprep.subr.mxu0 0.0
    %73 = vmatpush1.msra.mxu0 0.0
    %74 = vmatprep.subr.mxu0 0.0
    %75 = vmatpush1.msra.mxu0 0.0
    %76 = vmatprep.subr.mxu0 0.0
    %77 = vmatpush1.msra.mxu0 0.0
    %78 = vmatprep.subr.mxu0 0.0
    %79 = vmatpush1.msra.mxu0 0.0
    %80 = vmatprep.subr.mxu0 0.0
    %81 = vmatpush1.msra.mxu0 0.0
    %82 = vmatprep.subr.mxu0 0.0
    %83 = vmatpush1.msra.mxu0 0.0
    %84 = vmatprep.subr.mxu0 0.0
    %85 = vmatpush1.msra.mxu0 0.0
    %86 = vmatprep.subr.mxu0 0.0
    %87 = vmatpush1.msra.mxu0 0.0
    %88 = vmatprep.subr.mxu0 0.0
    %89 = vmatpush1.msra.mxu0 0.0
    %90 = vmatprep.subr.mxu0 0.0
    %91 = vmatpush1.msra.mxu0 %v51
    %92 = vmatprep.subr.mxu0 0.0
    %93 = vmatpush1.msra.mxu0 %v50
    %94 = vmatprep.subr.mxu0 0.0
    %95 = vmatpush1.msra.mxu0 %v49
    %96 = vmatprep.subr.mxu0 0.0
    %97 = vmatpush1.msra.mxu0 %v48
    %98 = vmatprep.subr.mxu0 0.0
    %99 = vmatpush2.msra.mxu0 0.0
    %100 = vmatprep.subr.mxu0 0.0
    %101 = vmatpush2.msra.mxu0 0.0
    %102 = vmatprep.subr.mxu0 0.0
    %103 = vmatpush2.msra.mxu0 0.0
    %104 = vmatprep.subr.mxu0 0.0
    %105 = vmatpush2.msra.mxu0 0.0
    %106 = vmatprep.subr.mxu0 0.0
    %107 = vmatpush2.msra.mxu0 0.0
    %108 = vmatprep.subr.mxu0 0.0
    %109 = vmatpush2.msra.mxu0 0.0
    %110 = vmatprep.subr.mxu0 0.0
    %111 = vmatpush2.msra.mxu0 0.0
    %112 = vmatprep.subr.mxu0 0.0
    %113 = vmatpush2.msra.mxu0 0.0
    %114 = vmatprep.subr.mxu0 0.0
    %115 = vmatpush2.msra.mxu0 0.0
    %116 = vmatprep.subr.mxu0 0.0
    %117 = vmatpush2.msra.mxu0 0.0
    %118 = vmatprep.subr.mxu0 0.0
    %119 = vmatpush2.msra.mxu0 0.0
    %120 = vmatprep.subr.mxu0 0.0
    %121 = vmatpush2.msra.mxu0 0.0
    %122 = vmatprep.subr.mxu0 0.0
    %123 = vmatpush2.msra.mxu0 0.0
    %124 = vmatprep.subr.mxu0 0.0
    %125 = vmatpush2.msra.mxu0 0.0
    %126 = vmatprep.subr.mxu0 0.0
    %127 = vmatpush2.msra.mxu0 0.0
    %128 = vmatprep.subr.mxu0 0.0
    %129 = vmatpush2.msra.mxu0 0.0
    %130 = vmatprep.mubr.f32.mxu0 0.0
    %131 = vmatmul.mubr.f32.gmra.mxu0 %v61
    %v132 = vpop.f32.mrf.mxu0
    %v133 = vadd.f32 %v57, %v132
    %v134 = vpop.f32.mrf.mxu0
    %135 = vmatprep.mubr.f32.mxu0 0.0
    %136 = vmatmul.mubr.f32.gmra.mxu0 %v64
    %v137 = vpop.f32.mrf.mxu0
    %v138 = vadd.f32 %v57, %v137
    %v139 = vpop.f32.mrf.mxu0
    %140 = vdwg.mxu0
    %v141 = vmul.f32 %v133, 0.25
    %v142 = vmul.f32 %v138, 0.25
    %144 = vrot.lane.b32.xlu0 %v133, 96
    %v145 = vpop.permute.xlu0 %144
    %vm146 = vcmask 130048
    %v148 = vsel %vm146, %v141, 0
    %v150 = vsel %vm146, %v145, 0
    %152 = vmatprep.subr.mxu0 0.0
    %153 = vmatpush1.xpose.msra.mxu0 0.0
    %154 = vmatprep.subr.mxu0 0.0
    %155 = vmatpush1.xpose.msra.mxu0 0.0
    %156 = vmatprep.subr.mxu0 0.0
    %157 = vmatpush1.xpose.msra.mxu0 0.0
    %158 = vmatprep.subr.mxu0 0.0
    %159 = vmatpush1.xpose.msra.mxu0 0.0
    %160 = vmatprep.subr.mxu0 0.0
    %161 = vmatpush1.xpose.msra.mxu0 0.0
    %162 = vmatprep.subr.mxu0 0.0
    %163 = vmatpush1.xpose.msra.mxu0 0.0
    %164 = vmatprep.subr.mxu0 0.0
    %165 = vmatpush1.xpose.msra.mxu0 0.0
    %166 = vmatprep.subr.mxu0 0.0
    %167 = vmatpush1.xpose.msra.mxu0 0.0
    %168 = vmatprep.subr.mxu0 0.0
    %169 = vmatpush1.xpose.msra.mxu0 0.0
    %170 = vmatprep.subr.mxu0 0.0
    %171 = vmatpush1.xpose.msra.mxu0 0.0
    %172 = vmatprep.subr.mxu0 0.0
    %173 = vmatpush1.xpose.msra.mxu0 0.0
    %174 = vmatprep.subr.mxu0 0.0
    %175 = vmatpush1.xpose.msra.mxu0 0.0
    %176 = vmatprep.subr.mxu0 0.0
    %177 = vmatpush1.xpose.msra.mxu0 0.0
    %178 = vmatprep.subr.mxu0 0.0
    %179 = vmatpush1.xpose.msra.mxu0 0.0
    %180 = vmatprep.subr.mxu0 0.0
    %181 = vmatpush1.xpose.msra.mxu0 0.0
    %182 = vmatprep.subr.mxu0 0.0
    %183 = vmatpush1.xpose.msra.mxu0 %v150
    %184 = vmatprep.subr.mxu0 0.0
    %185 = vmatpush2.xpose.msra.mxu0 0.0
    %186 = vmatprep.subr.mxu0 0.0
    %187 = vmatpush2.xpose.msra.mxu0 0.0
    %188 = vmatprep.subr.mxu0 0.0
    %189 = vmatpush2.xpose.msra.mxu0 0.0
    %190 = vmatprep.subr.mxu0 0.0
    %191 = vmatpush2.xpose.msra.mxu0 0.0
    %192 = vmatprep.subr.mxu0 0.0
    %193 = vmatpush2.xpose.msra.mxu0 0.0
    %194 = vmatprep.subr.mxu0 0.0
    %195 = vmatpush2.xpose.msra.mxu0 0.0
    %196 = vmatprep.subr.mxu0 0.0
    %197 = vmatpush2.xpose.msra.mxu0 0.0
    %198 = vmatprep.subr.mxu0 0.0
    %199 = vmatpush2.xpose.msra.mxu0 0.0
    %200 = vmatprep.subr.mxu0 0.0
    %201 = vmatpush2.xpose.msra.mxu0 0.0
    %202 = vmatprep.subr.mxu0 0.0
    %203 = vmatpush2.xpose.msra.mxu0 0.0
    %204 = vmatprep.subr.mxu0 0.0
    %205 = vmatpush2.xpose.msra.mxu0 0.0
    %206 = vmatprep.subr.mxu0 0.0
    %207 = vmatpush2.xpose.msra.mxu0 0.0
    %208 = vmatprep.subr.mxu0 0.0
    %209 = vmatpush2.xpose.msra.mxu0 0.0
    %210 = vmatprep.subr.mxu0 0.0
    %211 = vmatpush2.xpose.msra.mxu0 0.0
    %212 = vmatprep.subr.mxu0 0.0
    %213 = vmatpush2.xpose.msra.mxu0 0.0
    %214 = vmatprep.subr.mxu0 0.0
    %215 = vmatpush2.xpose.msra.mxu0 0.0
    %216 = vmatprep.mubr.f32.mxu0 0.0
    %217 = vmatmul.mubr.f32.gmra.mxu0 %v148
    %v218 = vpop.f32.mrf.mxu0
    %v219 = vadd.f32 0.0, %v218
    %v220 = vpop.f32.mrf.mxu0
    %221 = vdwg.mxu0
    %223 = vrot.lane.b32.xlu0 %v138, 96
    %v224 = vpop.permute.xlu0 %223
    %v226 = vsel %vm146, %v142, 0
    %v228 = vsel %vm146, %v224, 0
    %230 = vmatprep.subr.mxu0 0.0
    %231 = vmatpush1.xpose.msra.mxu0 0.0
    %232 = vmatprep.subr.mxu0 0.0
    %233 = vmatpush1.xpose.msra.mxu0 0.0
    %234 = vmatprep.subr.mxu0 0.0
    %235 = vmatpush1.xpose.msra.mxu0 0.0
    %236 = vmatprep.subr.mxu0 0.0
    %237 = vmatpush1.xpose.msra.mxu0 0.0
    %238 = vmatprep.subr.mxu0 0.0
    %239 = vmatpush1.xpose.msra.mxu0 0.0
    %240 = vmatprep.subr.mxu0 0.0
    %241 = vmatpush1.xpose.msra.mxu0 0.0
    %242 = vmatprep.subr.mxu0 0.0
    %243 = vmatpush1.xpose.msra.mxu0 0.0
    %244 = vmatprep.subr.mxu0 0.0
    %245 = vmatpush1.xpose.msra.mxu0 0.0
    %246 = vmatprep.subr.mxu0 0.0
    %247 = vmatpush1.xpose.msra.mxu0 0.0
    %248 = vmatprep.subr.mxu0 0.0
    %249 = vmatpush1.xpose.msra.mxu0 0.0
    %250 = vmatprep.subr.mxu0 0.0
    %251 = vmatpush1.xpose.msra.mxu0 0.0
    %252 = vmatprep.subr.mxu0 0.0
    %253 = vmatpush1.xpose.msra.mxu0 0.0
    %254 = vmatprep.subr.mxu0 0.0
    %255 = vmatpush1.xpose.msra.mxu0 0.0
    %256 = vmatprep.subr.mxu0 0.0
    %257 = vmatpush1.xpose.msra.mxu0 0.0
    %258 = vmatprep.subr.mxu0 0.0
    %259 = vmatpush1.xpose.msra.mxu0 0.0
    %260 = vmatprep.subr.mxu0 0.0
    %261 = vmatpush1.xpose.msra.mxu0 %v228
    %262 = vmatprep.subr.mxu0 0.0
    %263 = vmatpush2.xpose.msra.mxu0 0.0
    %264 = vmatprep.subr.mxu0 0.0
    %265 = vmatpush2.xpose.msra.mxu0 0.0
    %266 = vmatprep.subr.mxu0 0.0
    %267 = vmatpush2.xpose.msra.mxu0 0.0
    %268 = vmatprep.subr.mxu0 0.0
    %269 = vmatpush2.xpose.msra.mxu0 0.0
    %270 = vmatprep.subr.mxu0 0.0
    %271 = vmatpush2.xpose.msra.mxu0 0.0
    %272 = vmatprep.subr.mxu0 0.0
    %273 = vmatpush2.xpose.msra.mxu0 0.0
    %274 = vmatprep.subr.mxu0 0.0
    %275 = vmatpush2.xpose.msra.mxu0 0.0
    %276 = vmatprep.subr.mxu0 0.0
    %277 = vmatpush2.xpose.msra.mxu0 0.0
    %278 = vmatprep.subr.mxu0 0.0
    %279 = vmatpush2.xpose.msra.mxu0 0.0
    %280 = vmatprep.subr.mxu0 0.0
    %281 = vmatpush2.xpose.msra.mxu0 0.0
    %282 = vmatprep.subr.mxu0 0.0
    %283 = vmatpush2.xpose.msra.mxu0 0.0
    %284 = vmatprep.subr.mxu0 0.0
    %285 = vmatpush2.xpose.msra.mxu0 0.0
    %286 = vmatprep.subr.mxu0 0.0
    %287 = vmatpush2.xpose.msra.mxu0 0.0
    %288 = vmatprep.subr.mxu0 0.0
    %289 = vmatpush2.xpose.msra.mxu0 0.0
    %290 = vmatprep.subr.mxu0 0.0
    %291 = vmatpush2.xpose.msra.mxu0 0.0
    %292 = vmatprep.subr.mxu0 0.0
    %293 = vmatpush2.xpose.msra.mxu0 0.0
    %294 = vmatprep.mubr.f32.mxu0 0.0
    %295 = vmatmul.mubr.f32.gmra.mxu0 %v226
    %v296 = vpop.f32.mrf.mxu0
    %v297 = vadd.f32 0.0, %v296
    %v298 = vpop.f32.mrf.mxu0
    %299 = vdwg.mxu0
    %vm300 = vcmask 64512
    %v301 = vsel %vm300, %v219, -inf
    %302 = vmax.xlane.f32.xlu0 %v301
    %v303 = vpop.xlane.xlu0 %302
    %v304 = vsel %vm300, %v297, -inf
    %305 = vmax.xlane.f32.xlu0 %v304
    %v306 = vpop.xlane.xlu0 %305
    %v307 = vsub.f32 %v219, %v303
    %v308 = vsub.f32 %v297, %v306
    %v309 = vmul.f32 %v307, 1.442695
    %v310 = vpow.pop %v309
    %v311 = vmul.f32 %v308, 1.442695
    %v312 = vpow.pop %v311
    %v313 = vsel %vm300, %v310, 0.0
    %314 = vadd.xlane.f32.xlu0 %v313
    %v315 = vpop.xlane.xlu0 %314
    %v316 = vsel %vm300, %v312, 0.0
    %317 = vadd.xlane.f32.xlu0 %v316
    %v318 = vpop.xlane.xlu0 %317
    %v319 = vrcp.pop %v315
    %v320 = vrcp.pop %v318
    %v321 = vmul.f32 %v310, %v319
    %v322 = vmul.f32 %v312, %v320
    %323 = vrot.lane.b32.xlu0 %v133, 64
    %v324 = vpop.permute.xlu0 %323
    %v327 = vsel %vm300, %v321, 0
    %329 = vmatprep.subr.mxu0 0.0
    %330 = vmatpush1.msra.mxu0 0.0
    %331 = vmatprep.subr.mxu0 0.0
    %332 = vmatpush1.msra.mxu0 0.0
    %333 = vmatprep.subr.mxu0 0.0
    %334 = vmatpush1.msra.mxu0 0.0
    %335 = vmatprep.subr.mxu0 0.0
    %336 = vmatpush1.msra.mxu0 0.0
    %337 = vmatprep.subr.mxu0 0.0
    %338 = vmatpush1.msra.mxu0 0.0
    %339 = vmatprep.subr.mxu0 0.0
    %340 = vmatpush1.msra.mxu0 0.0
    %341 = vmatprep.subr.mxu0 0.0
    %342 = vmatpush1.msra.mxu0 0.0
    %343 = vmatprep.subr.mxu0 0.0
    %344 = vmatpush1.msra.mxu0 0.0
    %345 = vmatprep.subr.mxu0 0.0
    %346 = vmatpush1.msra.mxu0 0.0
    %347 = vmatprep.subr.mxu0 0.0
    %348 = vmatpush1.msra.mxu0 0.0
    %349 = vmatprep.subr.mxu0 0.0
    %350 = vmatpush1.msra.mxu0 0.0
    %351 = vmatprep.subr.mxu0 0.0
    %352 = vmatpush1.msra.mxu0 0.0
    %353 = vmatprep.subr.mxu0 0.0
    %354 = vmatpush1.msra.mxu0 0.0
    %355 = vmatprep.subr.mxu0 0.0
    %356 = vmatpush1.msra.mxu0 0.0
    %357 = vmatprep.subr.mxu0 0.0
    %358 = vmatpush1.msra.mxu0 0.0
    %359 = vmatprep.subr.mxu0 0.0
    %360 = vmatpush1.msra.mxu0 %v324
    %361 = vmatprep.subr.mxu0 0.0
    %362 = vmatpush2.msra.mxu0 0.0
    %363 = vmatprep.subr.mxu0 0.0
    %364 = vmatpush2.msra.mxu0 0.0
    %365 = vmatprep.subr.mxu0 0.0
    %366 = vmatpush2.msra.mxu0 0.0
    %367 = vmatprep.subr.mxu0 0.0
    %368 = vmatpush2.msra.mxu0 0.0
    %369 = vmatprep.subr.mxu0 0.0
    %370 = vmatpush2.msra.mxu0 0.0
    %371 = vmatprep.subr.mxu0 0.0
    %372 = vmatpush2.msra.mxu0 0.0
    %373 = vmatprep.subr.mxu0 0.0
    %374 = vmatpush2.msra.mxu0 0.0
    %375 = vmatprep.subr.mxu0 0.0
    %376 = vmatpush2.msra.mxu0 0.0
    %377 = vmatprep.subr.mxu0 0.0
    %378 = vmatpush2.msra.mxu0 0.0
    %379 = vmatprep.subr.mxu0 0.0
    %380 = vmatpush2.msra.mxu0 0.0
    %381 = vmatprep.subr.mxu0 0.0
    %382 = vmatpush2.msra.mxu0 0.0
    %383 = vmatprep.subr.mxu0 0.0
    %384 = vmatpush2.msra.mxu0 0.0
    %385 = vmatprep.subr.mxu0 0.0
    %386 = vmatpush2.msra.mxu0 0.0
    %387 = vmatprep.subr.mxu0 0.0
    %388 = vmatpush2.msra.mxu0 0.0
    %389 = vmatprep.subr.mxu0 0.0
    %390 = vmatpush2.msra.mxu0 0.0
    %391 = vmatprep.subr.mxu0 0.0
    %392 = vmatpush2.msra.mxu0 0.0
    %393 = vmatprep.mubr.f32.mxu0 0.0
    %394 = vmatmul.mubr.f32.gmra.mxu0 %v327
    %v395 = vpop.f32.mrf.mxu0
    %v396 = vadd.f32 0.0, %v395
    %v397 = vpop.f32.mrf.mxu0
    %398 = vdwg.mxu0
    %399 = vrot.lane.b32.xlu0 %v138, 64
    %v400 = vpop.permute.xlu0 %399
    %v403 = vsel %vm300, %v322, 0
    %405 = vmatprep.subr.mxu0 0.0
    %406 = vmatpush1.msra.mxu0 0.0
    %407 = vmatprep.subr.mxu0 0.0
    %408 = vmatpush1.msra.mxu0 0.0
    %409 = vmatprep.subr.mxu0 0.0
    %410 = vmatpush1.msra.mxu0 0.0
    %411 = vmatprep.subr.mxu0 0.0
    %412 = vmatpush1.msra.mxu0 0.0
    %413 = vmatprep.subr.mxu0 0.0
    %414 = vmatpush1.msra.mxu0 0.0
    %415 = vmatprep.subr.mxu0 0.0
    %416 = vmatpush1.msra.mxu0 0.0
    %417 = vmatprep.subr.mxu0 0.0
    %418 = vmatpush1.msra.mxu0 0.0
    %419 = vmatprep.subr.mxu0 0.0
    %420 = vmatpush1.msra.mxu0 0.0
    %421 = vmatprep.subr.mxu0 0.0
    %422 = vmatpush1.msra.mxu0 0.0
    %423 = vmatprep.subr.mxu0 0.0
    %424 = vmatpush1.msra.mxu0 0.0
    %425 = vmatprep.subr.mxu0 0.0
    %426 = vmatpush1.msra.mxu0 0.0
    %427 = vmatprep.subr.mxu0 0.0
    %428 = vmatpush1.msra.mxu0 0.0
    %429 = vmatprep.subr.mxu0 0.0
    %430 = vmatpush1.msra.mxu0 0.0
    %431 = vmatprep.subr.mxu0 0.0
    %432 = vmatpush1.msra.mxu0 0.0
    %433 = vmatprep.subr.mxu0 0.0
    %434 = vmatpush1.msra.mxu0 0.0
    %435 = vmatprep.subr.mxu0 0.0
    %436 = vmatpush1.msra.mxu0 %v400
    %437 = vmatprep.subr.mxu0 0.0
    %438 = vmatpush2.msra.mxu0 0.0
    %439 = vmatprep.subr.mxu0 0.0
    %440 = vmatpush2.msra.mxu0 0.0
    %441 = vmatprep.subr.mxu0 0.0
    %442 = vmatpush2.msra.mxu0 0.0
    %443 = vmatprep.subr.mxu0 0.0
    %444 = vmatpush2.msra.mxu0 0.0
    %445 = vmatprep.subr.mxu0 0.0
    %446 = vmatpush2.msra.mxu0 0.0
    %447 = vmatprep.subr.mxu0 0.0
    %448 = vmatpush2.msra.mxu0 0.0
    %449 = vmatprep.subr.mxu0 0.0
    %450 = vmatpush2.msra.mxu0 0.0
    %451 = vmatprep.subr.mxu0 0.0
    %452 = vmatpush2.msra.mxu0 0.0
    %453 = vmatprep.subr.mxu0 0.0
    %454 = vmatpush2.msra.mxu0 0.0
    %455 = vmatprep.subr.mxu0 0.0
    %456 = vmatpush2.msra.mxu0 0.0
    %457 = vmatprep.subr.mxu0 0.0
    %458 = vmatpush2.msra.mxu0 0.0
    %459 = vmatprep.subr.mxu0 0.0
    %460 = vmatpush2.msra.mxu0 0.0
    %461 = vmatprep.subr.mxu0 0.0
    %462 = vmatpush2.msra.mxu0 0.0
    %463 = vmatprep.subr.mxu0 0.0
    %464 = vmatpush2.msra.mxu0 0.0
    %465 = vmatprep.subr.mxu0 0.0
    %466 = vmatpush2.msra.mxu0 0.0
    %467 = vmatprep.subr.mxu0 0.0
    %468 = vmatpush2.msra.mxu0 0.0
    %469 = vmatprep.mubr.f32.mxu0 0.0
    %470 = vmatmul.mubr.f32.gmra.mxu0 %v403
    %v471 = vpop.f32.mrf.mxu0
    %v472 = vadd.f32 0.0, %v471
    %v473 = vpop.f32.mrf.mxu0
    %474 = vdwg.mxu0
    %475 = vst.msk [vmem:[#allocation8] sm:$0xff] %vm300, %v321
    %476 = vst.msk [vmem:[#allocation8 + $0x8] sm:$0xff] %vm300, %v322
    %477 = vrot.lane.b32.xlu0 %v141, 112
    %v478 = vpop.permute.xlu0 %477
    %479 = vrot.lane.b32.xlu0 %v133, 80
    %v480 = vpop.permute.xlu0 %479
    %v481 = vsel %vm146, %v478, 0
    %v483 = vsel %vm146, %v480, 0
    %485 = vmatprep.subr.mxu0 0.0
    %486 = vmatpush1.xpose.msra.mxu0 0.0
    %487 = vmatprep.subr.mxu0 0.0
    %488 = vmatpush1.xpose.msra.mxu0 0.0
    %489 = vmatprep.subr.mxu0 0.0
    %490 = vmatpush1.xpose.msra.mxu0 0.0
    %491 = vmatprep.subr.mxu0 0.0
    %492 = vmatpush1.xpose.msra.mxu0 0.0
    %493 = vmatprep.subr.mxu0 0.0
    %494 = vmatpush1.xpose.msra.mxu0 0.0
    %495 = vmatprep.subr.mxu0 0.0
    %496 = vmatpush1.xpose.msra.mxu0 0.0
    %497 = vmatprep.subr.mxu0 0.0
    %498 = vmatpush1.xpose.msra.mxu0 0.0
    %499 = vmatprep.subr.mxu0 0.0
    %500 = vmatpush1.xpose.msra.mxu0 0.0
    %501 = vmatprep.subr.mxu0 0.0
    %502 = vmatpush1.xpose.msra.mxu0 0.0
    %503 = vmatprep.subr.mxu0 0.0
    %504 = vmatpush1.xpose.msra.mxu0 0.0
    %505 = vmatprep.subr.mxu0 0.0
    %506 = vmatpush1.xpose.msra.mxu0 0.0
    %507 = vmatprep.subr.mxu0 0.0
    %508 = vmatpush1.xpose.msra.mxu0 0.0
    %509 = vmatprep.subr.mxu0 0.0
    %510 = vmatpush1.xpose.msra.mxu0 0.0
    %511 = vmatprep.subr.mxu0 0.0
    %512 = vmatpush1.xpose.msra.mxu0 0.0
    %513 = vmatprep.subr.mxu0 0.0
    %514 = vmatpush1.xpose.msra.mxu0 0.0
    %515 = vmatprep.subr.mxu0 0.0
    %516 = vmatpush1.xpose.msra.mxu0 %v483
    %517 = vmatprep.subr.mxu0 0.0
    %518 = vmatpush2.xpose.msra.mxu0 0.0
    %519 = vmatprep.subr.mxu0 0.0
    %520 = vmatpush2.xpose.msra.mxu0 0.0
    %521 = vmatprep.subr.mxu0 0.0
    %522 = vmatpush2.xpose.msra.mxu0 0.0
    %523 = vmatprep.subr.mxu0 0.0
    %524 = vmatpush2.xpose.msra.mxu0 0.0
    %525 = vmatprep.subr.mxu0 0.0
    %526 = vmatpush2.xpose.msra.mxu0 0.0
    %527 = vmatprep.subr.mxu0 0.0
    %528 = vmatpush2.xpose.msra.mxu0 0.0
    %529 = vmatprep.subr.mxu0 0.0
    %530 = vmatpush2.xpose.msra.mxu0 0.0
    %531 = vmatprep.subr.mxu0 0.0
    %532 = vmatpush2.xpose.msra.mxu0 0.0
    %533 = vmatprep.subr.mxu0 0.0
    %534 = vmatpush2.xpose.msra.mxu0 0.0
    %535 = vmatprep.subr.mxu0 0.0
    %536 = vmatpush2.xpose.msra.mxu0 0.0
    %537 = vmatprep.subr.mxu0 0.0
    %538 = vmatpush2.xpose.msra.mxu0 0.0
    %539 = vmatprep.subr.mxu0 0.0
    %540 = vmatpush2.xpose.msra.mxu0 0.0
    %541 = vmatprep.subr.mxu0 0.0
    %542 = vmatpush2.xpose.msra.mxu0 0.0
    %543 = vmatprep.subr.mxu0 0.0
    %544 = vmatpush2.xpose.msra.mxu0 0.0
    %545 = vmatprep.subr.mxu0 0.0
    %546 = vmatpush2.xpose.msra.mxu0 0.0
    %547 = vmatprep.subr.mxu0 0.0
    %548 = vmatpush2.xpose.msra.mxu0 0.0
    %549 = vmatprep.mubr.f32.mxu0 0.0
    %550 = vmatmul.mubr.f32.gmra.mxu0 %v481
    %v551 = vpop.f32.mrf.mxu0
    %v552 = vadd.f32 0.0, %v551
    %v553 = vpop.f32.mrf.mxu0
    %554 = vdwg.mxu0
    %555 = vrot.lane.b32.xlu0 %v142, 112
    %v556 = vpop.permute.xlu0 %555
    %557 = vrot.lane.b32.xlu0 %v138, 80
    %v558 = vpop.permute.xlu0 %557
    %v559 = vsel %vm146, %v556, 0
    %v561 = vsel %vm146, %v558, 0
    %563 = vmatprep.subr.mxu0 0.0
    %564 = vmatpush1.xpose.msra.mxu0 0.0
    %565 = vmatprep.subr.mxu0 0.0
    %566 = vmatpush1.xpose.msra.mxu0 0.0
    %567 = vmatprep.subr.mxu0 0.0
    %568 = vmatpush1.xpose.msra.mxu0 0.0
    %569 = vmatprep.subr.mxu0 0.0
    %570 = vmatpush1.xpose.msra.mxu0 0.0
    %571 = vmatprep.subr.mxu0 0.0
    %572 = vmatpush1.xpose.msra.mxu0 0.0
    %573 = vmatprep.subr.mxu0 0.0
    %574 = vmatpush1.xpose.msra.mxu0 0.0
    %575 = vmatprep.subr.mxu0 0.0
    %576 = vmatpush1.xpose.msra.mxu0 0.0
    %577 = vmatprep.subr.mxu0 0.0
    %578 = vmatpush1.xpose.msra.mxu0 0.0
    %579 = vmatprep.subr.mxu0 0.0
    %580 = vmatpush1.xpose.msra.mxu0 0.0
    %581 = vmatprep.subr.mxu0 0.0
    %582 = vmatpush1.xpose.msra.mxu0 0.0
    %583 = vmatprep.subr.mxu0 0.0
    %584 = vmatpush1.xpose.msra.mxu0 0.0
    %585 = vmatprep.subr.mxu0 0.0
    %586 = vmatpush1.xpose.msra.mxu0 0.0
    %587 = vmatprep.subr.mxu0 0.0
    %588 = vmatpush1.xpose.msra.mxu0 0.0
    %589 = vmatprep.subr.mxu0 0.0
    %590 = vmatpush1.xpose.msra.mxu0 0.0
    %591 = vmatprep.subr.mxu0 0.0
    %592 = vmatpush1.xpose.msra.mxu0 0.0
    %593 = vmatprep.subr.mxu0 0.0
    %594 = vmatpush1.xpose.msra.mxu0 %v561
    %595 = vmatprep.subr.mxu0 0.0
    %596 = vmatpush2.xpose.msra.mxu0 0.0
    %597 = vmatprep.subr.mxu0 0.0
    %598 = vmatpush2.xpose.msra.mxu0 0.0
    %599 = vmatprep.subr.mxu0 0.0
    %600 = vmatpush2.xpose.msra.mxu0 0.0
    %601 = vmatprep.subr.mxu0 0.0
    %602 = vmatpush2.xpose.msra.mxu0 0.0
    %603 = vmatprep.subr.mxu0 0.0
    %604 = vmatpush2.xpose.msra.mxu0 0.0
    %605 = vmatprep.subr.mxu0 0.0
    %606 = vmatpush2.xpose.msra.mxu0 0.0
    %607 = vmatprep.subr.mxu0 0.0
    %608 = vmatpush2.xpose.msra.mxu0 0.0
    %609 = vmatprep.subr.mxu0 0.0
    %610 = vmatpush2.xpose.msra.mxu0 0.0
    %611 = vmatprep.subr.mxu0 0.0
    %612 = vmatpush2.xpose.msra.mxu0 0.0
    %613 = vmatprep.subr.mxu0 0.0
    %614 = vmatpush2.xpose.msra.mxu0 0.0
    %615 = vmatprep.subr.mxu0 0.0
    %616 = vmatpush2.xpose.msra.mxu0 0.0
    %617 = vmatprep.subr.mxu0 0.0
    %618 = vmatpush2.xpose.msra.mxu0 0.0
    %619 = vmatprep.subr.mxu0 0.0
    %620 = vmatpush2.xpose.msra.mxu0 0.0
    %621 = vmatprep.subr.mxu0 0.0
    %622 = vmatpush2.xpose.msra.mxu0 0.0
    %623 = vmatprep.subr.mxu0 0.0
    %624 = vmatpush2.xpose.msra.mxu0 0.0
    %625 = vmatprep.subr.mxu0 0.0
    %626 = vmatpush2.xpose.msra.mxu0 0.0
    %627 = vmatprep.mubr.f32.mxu0 0.0
    %628 = vmatmul.mubr.f32.gmra.mxu0 %v559
    %v629 = vpop.f32.mrf.mxu0
    %v630 = vadd.f32 0.0, %v629
    %v631 = vpop.f32.mrf.mxu0
    %632 = vdwg.mxu0
    %v633 = vsel %vm300, %v552, -inf
    %634 = vmax.xlane.f32.xlu0 %v633
    %v635 = vpop.xlane.xlu0 %634
    %v636 = vsel %vm300, %v630, -inf
    %637 = vmax.xlane.f32.xlu0 %v636
    %v638 = vpop.xlane.xlu0 %637
    %v639 = vsub.f32 %v552, %v635
    %v640 = vsub.f32 %v630, %v638
    %v641 = vmul.f32 %v639, 1.442695
    %v642 = vpow.pop %v641
    %v643 = vmul.f32 %v640, 1.442695
    %v644 = vpow.pop %v643
    %v645 = vsel %vm300, %v642, 0.0
    %646 = vadd.xlane.f32.xlu0 %v645
    %v647 = vpop.xlane.xlu0 %646
    %v648 = vsel %vm300, %v644, 0.0
    %649 = vadd.xlane.f32.xlu0 %v648
    %v650 = vpop.xlane.xlu0 %649
    %v651 = vrcp.pop %v647
    %v652 = vrcp.pop %v650
    %v653 = vmul.f32 %v642, %v651
    %v654 = vmul.f32 %v644, %v652
    %655 = vrot.lane.b32.xlu0 %v133, 48
    %v656 = vpop.permute.xlu0 %655
    %v659 = vsel %vm300, %v653, 0
    %661 = vmatprep.subr.mxu0 0.0
    %662 = vmatpush1.msra.mxu0 0.0
    %663 = vmatprep.subr.mxu0 0.0
    %664 = vmatpush1.msra.mxu0 0.0
    %665 = vmatprep.subr.mxu0 0.0
    %666 = vmatpush1.msra.mxu0 0.0
    %667 = vmatprep.subr.mxu0 0.0
    %668 = vmatpush1.msra.mxu0 0.0
    %669 = vmatprep.subr.mxu0 0.0
    %670 = vmatpush1.msra.mxu0 0.0
    %671 = vmatprep.subr.mxu0 0.0
    %672 = vmatpush1.msra.mxu0 0.0
    %673 = vmatprep.subr.mxu0 0.0
    %674 = vmatpush1.msra.mxu0 0.0
    %675 = vmatprep.subr.mxu0 0.0
    %676 = vmatpush1.msra.mxu0 0.0
    %677 = vmatprep.subr.mxu0 0.0
    %678 = vmatpush1.msra.mxu0 0.0
    %679 = vmatprep.subr.mxu0 0.0
    %680 = vmatpush1.msra.mxu0 0.0
    %681 = vmatprep.subr.mxu0 0.0
    %682 = vmatpush1.msra.mxu0 0.0
    %683 = vmatprep.subr.mxu0 0.0
    %684 = vmatpush1.msra.mxu0 0.0
    %685 = vmatprep.subr.mxu0 0.0
    %686 = vmatpush1.msra.mxu0 0.0
    %687 = vmatprep.subr.mxu0 0.0
    %688 = vmatpush1.msra.mxu0 0.0
    %689 = vmatprep.subr.mxu0 0.0
    %690 = vmatpush1.msra.mxu0 0.0
    %691 = vmatprep.subr.mxu0 0.0
    %692 = vmatpush1.msra.mxu0 %v656
    %693 = vmatprep.subr.mxu0 0.0
    %694 = vmatpush2.msra.mxu0 0.0
    %695 = vmatprep.subr.mxu0 0.0
    %696 = vmatpush2.msra.mxu0 0.0
    %697 = vmatprep.subr.mxu0 0.0
    %698 = vmatpush2.msra.mxu0 0.0
    %699 = vmatprep.subr.mxu0 0.0
    %700 = vmatpush2.msra.mxu0 0.0
    %701 = vmatprep.subr.mxu0 0.0
    %702 = vmatpush2.msra.mxu0 0.0
    %703 = vmatprep.subr.mxu0 0.0
    %704 = vmatpush2.msra.mxu0 0.0
    %705 = vmatprep.subr.mxu0 0.0
    %706 = vmatpush2.msra.mxu0 0.0
    %707 = vmatprep.subr.mxu0 0.0
    %708 = vmatpush2.msra.mxu0 0.0
    %709 = vmatprep.subr.mxu0 0.0
    %710 = vmatpush2.msra.mxu0 0.0
    %711 = vmatprep.subr.mxu0 0.0
    %712 = vmatpush2.msra.mxu0 0.0
    %713 = vmatprep.subr.mxu0 0.0
    %714 = vmatpush2.msra.mxu0 0.0
    %715 = vmatprep.subr.mxu0 0.0
    %716 = vmatpush2.msra.mxu0 0.0
    %717 = vmatprep.subr.mxu0 0.0
    %718 = vmatpush2.msra.mxu0 0.0
    %719 = vmatprep.subr.mxu0 0.0
    %720 = vmatpush2.msra.mxu0 0.0
    %721 = vmatprep.subr.mxu0 0.0
    %722 = vmatpush2.msra.mxu0 0.0
    %723 = vmatprep.subr.mxu0 0.0
    %724 = vmatpush2.msra.mxu0 0.0
    %725 = vmatprep.mubr.f32.mxu0 0.0
    %726 = vmatmul.mubr.f32.gmra.mxu0 %v659
    %v727 = vpop.f32.mrf.mxu0
    %v728 = vadd.f32 0.0, %v727
    %v729 = vpop.f32.mrf.mxu0
    %730 = vdwg.mxu0
    %731 = vrot.lane.b32.xlu0 %v138, 48
    %v732 = vpop.permute.xlu0 %731
    %v735 = vsel %vm300, %v654, 0
    %737 = vmatprep.subr.mxu0 0.0
    %738 = vmatpush1.msra.mxu0 0.0
    %739 = vmatprep.subr.mxu0 0.0
    %740 = vmatpush1.msra.mxu0 0.0
    %741 = vmatprep.subr.mxu0 0.0
    %742 = vmatpush1.msra.mxu0 0.0
    %743 = vmatprep.subr.mxu0 0.0
    %744 = vmatpush1.msra.mxu0 0.0
    %745 = vmatprep.subr.mxu0 0.0
    %746 = vmatpush1.msra.mxu0 0.0
    %747 = vmatprep.subr.mxu0 0.0
    %748 = vmatpush1.msra.mxu0 0.0
    %749 = vmatprep.subr.mxu0 0.0
    %750 = vmatpush1.msra.mxu0 0.0
    %751 = vmatprep.subr.mxu0 0.0
    %752 = vmatpush1.msra.mxu0 0.0
    %753 = vmatprep.subr.mxu0 0.0
    %754 = vmatpush1.msra.mxu0 0.0
    %755 = vmatprep.subr.mxu0 0.0
    %756 = vmatpush1.msra.mxu0 0.0
    %757 = vmatprep.subr.mxu0 0.0
    %758 = vmatpush1.msra.mxu0 0.0
    %759 = vmatprep.subr.mxu0 0.0
    %760 = vmatpush1.msra.mxu0 0.0
    %761 = vmatprep.subr.mxu0 0.0
    %762 = vmatpush1.msra.mxu0 0.0
    %763 = vmatprep.subr.mxu0 0.0
    %764 = vmatpush1.msra.mxu0 0.0
    %765 = vmatprep.subr.mxu0 0.0
    %766 = vmatpush1.msra.mxu0 0.0
    %767 = vmatprep.subr.mxu0 0.0
    %768 = vmatpush1.msra.mxu0 %v732
    %769 = vmatprep.subr.mxu0 0.0
    %770 = vmatpush2.msra.mxu0 0.0
    %771 = vmatprep.subr.mxu0 0.0
    %772 = vmatpush2.msra.mxu0 0.0
    %773 = vmatprep.subr.mxu0 0.0
    %774 = vmatpush2.msra.mxu0 0.0
    %775 = vmatprep.subr.mxu0 0.0
    %776 = vmatpush2.msra.mxu0 0.0
    %777 = vmatprep.subr.mxu0 0.0
    %778 = vmatpush2.msra.mxu0 0.0
    %779 = vmatprep.subr.mxu0 0.0
    %780 = vmatpush2.msra.mxu0 0.0
    %781 = vmatprep.subr.mxu0 0.0
    %782 = vmatpush2.msra.mxu0 0.0
    %783 = vmatprep.subr.mxu0 0.0
    %784 = vmatpush2.msra.mxu0 0.0
    %785 = vmatprep.subr.mxu0 0.0
    %786 = vmatpush2.msra.mxu0 0.0
    %787 = vmatprep.subr.mxu0 0.0
    %788 = vmatpush2.msra.mxu0 0.0
    %789 = vmatprep.subr.mxu0 0.0
    %790 = vmatpush2.msra.mxu0 0.0
    %791 = vmatprep.subr.mxu0 0.0
    %792 = vmatpush2.msra.mxu0 0.0
    %793 = vmatprep.subr.mxu0 0.0
    %794 = vmatpush2.msra.mxu0 0.0
    %795 = vmatprep.subr.mxu0 0.0
    %796 = vmatpush2.msra.mxu0 0.0
    %797 = vmatprep.subr.mxu0 0.0
    %798 = vmatpush2.msra.mxu0 0.0
    %799 = vmatprep.subr.mxu0 0.0
    %800 = vmatpush2.msra.mxu0 0.0
    %801 = vmatprep.mubr.f32.mxu0 0.0
    %802 = vmatmul.mubr.f32.gmra.mxu0 %v735
    %v803 = vpop.f32.mrf.mxu0
    %v804 = vadd.f32 0.0, %v803
    %v805 = vpop.f32.mrf.mxu0
    %806 = vdwg.mxu0
    %s807 = scalar_lea.vmem [#allocation8], 16
    %808 = vst.msk [vmem:[%s807] sm:$0xff] %vm300, %v653
    %809 = vst.msk [vmem:[%s807 + $0x8] sm:$0xff] %vm300, %v654
    %812 = vrot.lane.b32.xlu0 %v728, 16
    %v813 = vpop.permute.xlu0 %812
    %814 = vrot.lane.b32.xlu0 %v804, 16
    %v815 = vpop.permute.xlu0 %814
    %v818 = vsel %vm146, %v396, %v813
    %v819 = vsel %vm146, %v472, %v815
    %820 = vst.msk [vmem:[#allocation7] sm:$0xff] %vm59, %v818
    %821 = vst.msk [vmem:[#allocation7 + $0x8] sm:$0xff] %vm59, %v819
    // Predicated region
    $region22: #{tpu_custom_call.1} parent=1 // pred_check
      _
    $region23: #{tpu_custom_call.1} parent=1 // pred_check_branch
      %823 = sbr.rel (0) target = $region25
    $region24: #{tpu_custom_call.1} parent=1 // pred_region
      %s825 = ssub.s32 256, 256
      %826 = vsyncadd [#allocation4], %s825
      %s827 = sshll.u32 [#allocation7], 4
      %s828 = int_to_ptr.vmem [resolvable:$true] %s827
      %833 = dma.vmem_to_hbm [thread:$0]  %s828, 256, %s3, [#allocation4], 128, 128, 8
    $region25: #{tpu_custom_call.1} parent=1 // pred_fallthru
      _
    // Predicated region
    $region26: #{tpu_custom_call.1} parent=1 // pred_check
      _
    $region27: #{tpu_custom_call.1} parent=1 // pred_check_branch
      %835 = sbr.rel (0) target = $region29
    $region28: #{tpu_custom_call.1} parent=1 // pred_region
      %s837 = ssub.s32 512, 512
      %838 = vsyncadd [#allocation9], %s837
      %s839 = sshll.u32 [#allocation8], 4
      %s840 = int_to_ptr.vmem [resolvable:$true] %s839
      %845 = dma.vmem_to_hbm [thread:$0]  %s840, 512, %s4, [#allocation9], 128, 128, 8
    $region29: #{tpu_custom_call.1} parent=1 // pred_fallthru
      _
    // Predicated region
    $region30: #{tpu_custom_call.1} parent=1 // pred_check
      _
    $region31: #{tpu_custom_call.1} parent=1 // pred_check_branch
      %847 = sbr.rel (0) target = $region33
    $region32: #{tpu_custom_call.1} parent=1 // pred_region
      %848 = dma.done [#allocation4], 256
    $region33: #{tpu_custom_call.1} parent=1 // pred_fallthru
      _
    // Predicated region
    $region34: #{tpu_custom_call.1} parent=1 // pred_check
      _
    $region35: #{tpu_custom_call.1} parent=1 // pred_check_branch
      %850 = sbr.rel (0) target = $region37
    $region36: #{tpu_custom_call.1} parent=1 // pred_region
      %851 = dma.done [#allocation9], 512
    $region37: #{tpu_custom_call.1} parent=1 // pred_fallthru
      _
    %852 = vsyncpa [#allocation3], 1
    %853 = vsyncpa [#allocation6], 1
    %854 = vsyncpa [#allocation4], 1
    %855 = vsyncpa [#allocation9], 1

</llo_original>
